<compile_context>
chip_gen: v7x
topology: tpu7x:2x2x1
jax: 0.10.0
libtpu: 0.0.40
codegen_flags: <defaults>
</compile_context>

<pallas_src>
import functools

import jax
import jax.numpy as jnp
from jax.experimental import pallas as pl
from jax.experimental.pallas import tpu as pltpu

_LANES = 128
_MAX_BLOCK_ROWS = 4096             # 4096*128*4 B = 2 MiB per f32 MSE input tile
_CE_TILE_BUDGET = 4 * 1024 * 1024  # ~4 MiB of f32 logits per CE tile (temps ~3-4x)
_VMEM_LIMIT = 32 * 1024 * 1024     # explicit scoped-VMEM limit, < physical on all gens
_MAX_CORES = 2                     # v7x has 2 TensorCores; harmless on 1-TC chips


def _cdiv(a, b):
    return -(-a // b)


def _round_up(x, m):
    return ((x + m - 1) // m) * m


def _round_down(x, m):
    return (x // m) * m


def _bytes(x):
    return int(x.size) * x.dtype.itemsize


# --------------------------------------------------------------------------
# Kernels
# --------------------------------------------------------------------------

def _sq_diff_sum_kernel(a_ref, b_ref, out_ref, *, block_rows, n_rows,
                        blocks_per_core):
    """Accumulate lane-partial sums of (a-b)^2 into a (1,1,128) per-core block."""
    c = pl.program_id(0)   # core axis ("parallel")
    i = pl.program_id(1)   # streaming axis ("arbitrary")

    @pl.when(i == 0)
    def _init():
        out_ref[...] = jnp.zeros_like(out_ref)

    row0 = (c * blocks_per_core + i) * block_rows
    # Native-dtype DMA; upcast in VMEM (VPU work hidden under the DMA).
    d = a_ref[...].astype(jnp.float32) - b_ref[...].astype(jnp.float32)
    # Mask rows past the real slab end (ragged tail block / redundant clamped
    # block on the last core).
    row_ids = jax.lax.broadcasted_iota(jnp.int32, (block_rows, 1), 0)
    d = jnp.where(row_ids < (n_rows - row0), d, 0.0)
    out_ref[...] += jnp.sum(d * d, axis=0, keepdims=True)[None]


def _ce_sum_kernel(logits_ref, labels_ref, out_ref, *, pad_idx, tn, n_rows,
                   blocks_per_core):
    """Accumulate sum-reduced CE (ignore_index=pad_idx) into a per-core scalar."""
    c = pl.program_id(0)
    i = pl.program_id(1)

    @pl.when(i == 0)
    def _init():
        out_ref[...] = jnp.zeros_like(out_ref)

    row0 = (c * blocks_per_core + i) * tn
    logits = logits_ref[...].astype(jnp.float32)     # (tn, V), upcast in VMEM
    labels = labels_ref[...]                         # (tn, 1) int32

    row_ids = row0 + jax.lax.broadcasted_iota(jnp.int32, (tn, 1), 0)
    row_ok = row_ids < n_rows                        # (tn, 1)
    # Neutralise garbage tail rows BEFORE max/exp so no NaN/Inf can leak
    # through the final mask (NaN * 0 = NaN).
    logits = jnp.where(row_ok, logits, 0.0)

    m = jnp.max(logits, axis=-1, keepdims=True)      # (tn, 1)
    shifted = logits - m                             # reused for exp AND target gather
    sum_exp = jnp.sum(jnp.exp(shifted), axis=-1, keepdims=True)
    col = jax.lax.broadcasted_iota(jnp.int32, shifted.shape, 1)
    # logits[label] - m  (labels >= V would silently give 0, as before).
    tgt_shifted = jnp.sum(jnp.where(col == labels, shifted, 0.0),
                          axis=-1, keepdims=True)

    valid = row_ok & (labels != pad_idx)
    # lse - logits[label] = log(sum_exp) - (logits[label] - m)
    row_ce = jnp.where(valid, jnp.log(sum_exp) - tgt_shifted, 0.0)   # (tn, 1)
    out_ref[...] += jnp.sum(row_ce, axis=0, keepdims=True)[None]     # (1,1,1)


# --------------------------------------------------------------------------
# pallas_call wrappers
# --------------------------------------------------------------------------

def _sum_sq_diff(a, b):
    """sum((a-b)^2) over all elements, streamed through VMEM in native dtype."""
    n = int(a.size)

    def slab(x):
        flat = x.reshape(-1)
        if n % _LANES != 0:
            # TODO(synk): rare ragged case — this small pad materializes a copy;
            # could be removed with allow_input_fusion or a scalar tail pass.
            flat = jnp.pad(flat, (0, _round_up(n, _LANES) - n))
        return flat.reshape(-1, _LANES)              # free bitcast when no pad

    a2d, b2d = slab(a), slab(b)
    rows = a2d.shape[0]
    block_rows = rows if rows <= _MAX_BLOCK_ROWS else _MAX_BLOCK_ROWS
    nblocks = _cdiv(rows, block_rows)
    ncores = min(_MAX_CORES, nblocks)
    bpc = _cdiv(nblocks, ncores)

    def idx(c, i):
        # Clamp: blocks past the end (when nblocks % ncores != 0) re-read the
        # last valid block and are fully masked in-kernel.
        return (jnp.minimum(c * bpc + i, nblocks - 1), 0)

    cost = pl.CostEstimate(
        flops=int(4 * rows * _LANES),
        transcendentals=0,
        bytes_accessed=int(_bytes(a2d) + _bytes(b2d) + ncores * _LANES * 4))

    out = pl.pallas_call(
        functools.partial(_sq_diff_sum_kernel, block_rows=block_rows,
                          n_rows=rows, blocks_per_core=bpc),
        out_shape=jax.ShapeDtypeStruct((ncores, 1, _LANES), jnp.float32),
        grid=(ncores, bpc),
        in_specs=[pl.BlockSpec((block_rows, _LANES), idx),
                  pl.BlockSpec((block_rows, _LANES), idx)],
        out_specs=pl.BlockSpec((1, 1, _LANES), lambda c, i: (c, 0, 0)),
        compiler_params=pltpu.CompilerParams(
            dimension_semantics=("parallel", "arbitrary"),
            vmem_limit_bytes=_VMEM_LIMIT),
        cost_estimate=cost,
    )(a2d, b2d)
    return jnp.sum(out)


def _ce_sum(logits, labels, pad_idx):
    """Sum-reduced cross entropy with ignore_index=pad_idx (PyTorch semantics)."""
    n, v = int(logits.shape[0]), int(logits.shape[1])

    # Rows per tile: ~_CE_TILE_BUDGET of f32 logits, multiple of 8 (or the
    # full token count, which is always a legal full-extent block).
    budget_rows = max(8, min(4096, _round_down(_CE_TILE_BUDGET // (v * 4), 8)))
    tn = n if n <= budget_rows else budget_rows
    # TODO(synk): for extremely large vocabularies (8 rows of logits alone
    # exceeding the VMEM budget) a vocab grid axis + online-softmax would be
    # needed; not required for this module's vocab sizes.

    nblocks = _cdiv(n, tn)
    ncores = min(_MAX_CORES, nblocks)
    bpc = _cdiv(nblocks, ncores)

    labels2d = labels.reshape(-1, 1).astype(jnp.int32)   # free bitcast-level reshape

    def idx(c, i):
        return (jnp.minimum(c * bpc + i, nblocks - 1), 0)

    cost = pl.CostEstimate(
        flops=int(6 * n * v),
        transcendentals=int(n * v + n),
        bytes_accessed=int(_bytes(logits) + _bytes(labels2d) + ncores * 4))

    out = pl.pallas_call(
        functools.partial(_ce_sum_kernel, pad_idx=pad_idx, tn=tn,
                          n_rows=n, blocks_per_core=bpc),
        out_shape=jax.ShapeDtypeStruct((ncores, 1, 1), jnp.float32),
        grid=(ncores, bpc),
        in_specs=[pl.BlockSpec((tn, v), idx),        # full-vocab block, native dtype
                  pl.BlockSpec((tn, 1), idx)],
        out_specs=pl.BlockSpec((1, 1, 1), lambda c, i: (c, 0, 0)),
        compiler_params=pltpu.CompilerParams(
            dimension_semantics=("parallel", "arbitrary"),
            vmem_limit_bytes=_VMEM_LIMIT),
        cost_estimate=cost,
    )(logits, labels2d)
    return jnp.sum(out)


def _kld_sum(mu, logvar):
    # Latents are (B, D): a few KB.  Plain jnp (XLA fuses it); a pallas_call
    # launch + HBM round-trips would cost more than the math (per perf review).
    mu = mu.astype(jnp.float32)
    lv = logvar.astype(jnp.float32)
    return -0.5 * jnp.sum(1.0 + lv - mu * mu - jnp.exp(lv))


def vlvae_loss(x_img, x_img_bar, x_txt, x_txt_bar,
               img_mu, img_logvar, txt_mu, txt_logvar,
               joint_mu, joint_logvar, *, pad_idx=0):
    """Pallas implementation of VLVAELoss.forward (returns the total loss scalar)."""
    # Dead inputs: the reference module computes kld_shared_reg_loss but never
    # adds it to the returned total — never DMA'd anywhere.
    del joint_mu, joint_logvar

    mse = _sum_sq_diff(x_img_bar, x_img)

    v = x_txt_bar.shape[-1]
    ce = _ce_sum(x_txt_bar.reshape(-1, v), x_txt.reshape(-1), pad_idx)

    kld = _kld_sum(img_mu, img_logvar) + _kld_sum(txt_mu, txt_logvar)

    return mse + ce + kld


# --------------------------------------------------------------------------
# Pure-JAX reference (mirrors the PyTorch forward exactly)
# --------------------------------------------------------------------------

def _reference(x_img, x_img_bar, x_txt, x_txt_bar,
               img_mu, img_logvar, txt_mu, txt_logvar,
               joint_mu, joint_logvar, pad_idx=0):
    mse = jnp.sum((x_img_bar - x_img) ** 2)
    kld_img = -0.5 * jnp.sum(1.0 + img_logvar - img_mu ** 2 - jnp.exp(img_logvar))
    v = x_txt_bar.shape[-1]
    logits = x_txt_bar.reshape(-1, v)
    labels = x_txt.reshape(-1)
    lse = jax.scipy.special.logsumexp(logits, axis=-1)
    tgt = jnp.take_along_axis(logits, labels[:, None], axis=-1)[:, 0]
    ce = jnp.sum(jnp.where(labels != pad_idx, lse - tgt, 0.0))
    kld_txt = -0.5 * jnp.sum(1.0 + txt_logvar - txt_mu ** 2 - jnp.exp(txt_logvar))
    # joint KLD is computed but NOT added in the reference module.
    return mse + kld_img + ce + kld_txt


if __name__ == "__main__":
    key = jax.random.PRNGKey(0)
    ks = jax.random.split(key, 10)

    B, C, H, W = 2, 4, 16, 16       # image
    S, V = 8, 32                    # text: seq len, vocab size
    D = 32                          # latent dim
    pad_idx = 0

    x_img = jax.random.normal(ks[0], (B, C, H, W), jnp.float32)
    x_img_bar = jax.random.normal(ks[1], (B, C, H, W), jnp.float32)
    x_txt = jax.random.randint(ks[2], (B, S), 0, V, jnp.int32)
    x_txt = x_txt.at[0, -2:].set(pad_idx)          # exercise ignore_index
    x_txt_bar = jax.random.normal(ks[3], (B, S, V), jnp.float32)
    img_mu = jax.random.normal(ks[4], (B, D), jnp.float32)
    img_logvar = 0.1 * jax.random.normal(ks[5], (B, D), jnp.float32)
    txt_mu = jax.random.normal(ks[6], (B, D), jnp.float32)
    txt_logvar = 0.1 * jax.random.normal(ks[7], (B, D), jnp.float32)
    joint_mu = jax.random.normal(ks[8], (B, D), jnp.float32)
    joint_logvar = 0.1 * jax.random.normal(ks[9], (B, D), jnp.float32)

    loss_fn = jax.jit(functools.partial(vlvae_loss, pad_idx=pad_idx))
    out = loss_fn(x_img, x_img_bar, x_txt, x_txt_bar,
                  img_mu, img_logvar, txt_mu, txt_logvar,
                  joint_mu, joint_logvar)
    out = jax.block_until_ready(out)

    ref = _reference(x_img, x_img_bar, x_txt, x_txt_bar,
                     img_mu, img_logvar, txt_mu, txt_logvar,
                     joint_mu, joint_logvar, pad_idx=pad_idx)

    assert out.shape == (), out.shape
    assert jnp.allclose(out, ref, rtol=1e-4, atol=1e-2), (float(out), float(ref))
    print("KERNEL_OK")
</pallas_src>

<mosaic_0001>
module attributes {stable_mosaic.version = 11 : i64} {
  func.func @_sq_diff_sum_kernel(%arg0: i32, %arg1: i32, %arg2: memref<16x128xf32, #tpu.memory_space<vmem>>, %arg3: memref<16x128xf32, #tpu.memory_space<vmem>>, %arg4: memref<1x1x128xf32, #tpu.memory_space<vmem>>) attributes {dimension_semantics = [#tpu.dimension_semantics<parallel>, #tpu.dimension_semantics<arbitrary>], iteration_bounds = array<i64: 1, 1>, scalar_prefetch = 0 : i64, scratch_operands = 0 : i64, tpu.core_type = #tpu.core_type<tc>, window_params = [{transform_indices = @transform_0, window_bounds = array<i64: 16, 128>}, {transform_indices = @transform_1, window_bounds = array<i64: 16, 128>}, {transform_indices = @transform_2, window_bounds = array<i64: 1, 1, 128>}]} {
    %c0_i32 = arith.constant 0 : i32
    %0 = arith.cmpi eq, %arg1, %c0_i32 : i32
    %1 = arith.extui %0 : i1 to i32
    %c0_i32_0 = arith.constant 0 : i32
    %2 = arith.cmpi ne, %1, %c0_i32_0 : i32
    scf.if %2 {
      %cst_12 = arith.constant 0.000000e+00 : f32
      %24 = vector.broadcast %cst_12 : f32 to vector<1x1x128xf32>
      %c0_13 = arith.constant 0 : index
      %c0_14 = arith.constant 0 : index
      %c0_15 = arith.constant 0 : index
      %25 = vector.load %arg4[%c0_13, %c0_14, %c0_15] : memref<1x1x128xf32, #tpu.memory_space<vmem>>, vector<1x1x128xf32>
      tpu.vector_store %arg4[%c0_13, %c0_14, %c0_15], %24 {strides = array<i32>} : memref<1x1x128xf32, #tpu.memory_space<vmem>>, vector<1x1x128xf32>,
    } else {
    }
    %c1_i32 = arith.constant 1 : i32
    %3 = arith.muli %arg0, %c1_i32 : i32
    %4 = arith.addi %3, %arg1 : i32
    %c16_i32 = arith.constant 16 : i32
    %5 = arith.muli %4, %c16_i32 : i32
    %c0 = arith.constant 0 : index
    %c0_1 = arith.constant 0 : index
    %6 = vector.load %arg2[%c0, %c0_1] : memref<16x128xf32, #tpu.memory_space<vmem>>, vector<16x128xf32>
    %c0_2 = arith.constant 0 : index
    %c0_3 = arith.constant 0 : index
    %7 = vector.load %arg3[%c0_2, %c0_3] : memref<16x128xf32, #tpu.memory_space<vmem>>, vector<16x128xf32>
    %8 = arith.subf %6, %7 : vector<16x128xf32>
    %9 = tpu.iota {dimensions = array<i32: 0>} : vector<16x1xi32>
    %c16_i32_4 = arith.constant 16 : i32
    %10 = arith.subi %c16_i32_4, %5 : i32
    %11 = vector.broadcast %10 : i32 to vector<16x1xi32>
    %12 = arith.cmpi slt, %9, %11 : vector<16x1xi32>
    %cst = arith.constant 0.000000e+00 : f32
    %13 = vector.shape_cast %12 : vector<16x1xi1> to vector<16x1xi1>
    %14 = vector.broadcast %13 : vector<16x1xi1> to vector<16x128xi1>
    %15 = vector.broadcast %cst : f32 to vector<16x128xf32>
    %16 = arith.select %14, %8, %15 : vector<16x128xi1>, vector<16x128xf32>
    %c0_5 = arith.constant 0 : index
    %c0_6 = arith.constant 0 : index
    %c0_7 = arith.constant 0 : index
    %17 = vector.load %arg4[%c0_5, %c0_6, %c0_7] : memref<1x1x128xf32, #tpu.memory_space<vmem>>, vector<1x1x128xf32>
    %18 = arith.mulf %16, %16 : vector<16x128xf32>
    %cst_8 = arith.constant dense<0.000000e+00> : vector<128xf32>
    %19 = vector.multi_reduction <add>, %18, %cst_8 [0] : vector<16x128xf32> to vector<128xf32>
    %20 = vector.shape_cast %19 : vector<128xf32> to vector<1x128xf32>
    %21 = vector.shape_cast %20 : vector<1x128xf32> to vector<1x1x128xf32>
    %22 = arith.addf %17, %21 : vector<1x1x128xf32>
    %c0_9 = arith.constant 0 : index
    %c0_10 = arith.constant 0 : index
    %c0_11 = arith.constant 0 : index
    %23 = vector.load %arg4[%c0_9, %c0_10, %c0_11] : memref<1x1x128xf32, #tpu.memory_space<vmem>>, vector<1x1x128xf32>
    tpu.vector_store %arg4[%c0_9, %c0_10, %c0_11], %22 {strides = array<i32>} : memref<1x1x128xf32, #tpu.memory_space<vmem>>, vector<1x1x128xf32>,
    return
  }
  func.func @transform_0(%arg0: i32, %arg1: i32) -> (i32, i32) {
    %c1_i32 = arith.constant 1 : i32
    %0 = arith.muli %arg0, %c1_i32 : i32
    %1 = arith.addi %0, %arg1 : i32
    %c0_i32 = arith.constant 0 : i32
    %2 = arith.minsi %1, %c0_i32 : i32
    %c0_i32_0 = arith.constant 0 : i32
    %c0_i32_1 = arith.constant 0 : i32
    return %2, %c0_i32_0 : i32, i32
  }
  func.func @transform_1(%arg0: i32, %arg1: i32) -> (i32, i32) {
    %c1_i32 = arith.constant 1 : i32
    %0 = arith.muli %arg0, %c1_i32 : i32
    %1 = arith.addi %0, %arg1 : i32
    %c0_i32 = arith.constant 0 : i32
    %2 = arith.minsi %1, %c0_i32 : i32
    %c0_i32_0 = arith.constant 0 : i32
    %c0_i32_1 = arith.constant 0 : i32
    return %2, %c0_i32_0 : i32, i32
  }
  func.func @transform_2(%arg0: i32, %arg1: i32) -> (i32, i32, i32) {
    %c0_i32 = arith.constant 0 : i32
    %c0_i32_0 = arith.constant 0 : i32
    %c0_i32_1 = arith.constant 0 : i32
    return %arg0, %c0_i32, %c0_i32_0 : i32, i32, i32
  }
}

module attributes {stable_mosaic.version = 11 : i64} {
  func.func @_ce_sum_kernel(%arg0: i32, %arg1: i32, %arg2: memref<16x32xf32, #tpu.memory_space<vmem>>, %arg3: memref<16x1xi32, #tpu.memory_space<vmem>>, %arg4: memref<1x1x1xf32, #tpu.memory_space<vmem>>) attributes {dimension_semantics = [#tpu.dimension_semantics<parallel>, #tpu.dimension_semantics<arbitrary>], iteration_bounds = array<i64: 1, 1>, scalar_prefetch = 0 : i64, scratch_operands = 0 : i64, tpu.core_type = #tpu.core_type<tc>, window_params = [{transform_indices = @transform_0, window_bounds = array<i64: 16, 32>}, {transform_indices = @transform_1, window_bounds = array<i64: 16, 1>}, {transform_indices = @transform_2, window_bounds = array<i64: 1, 1, 1>}]} {
    %c0_i32 = arith.constant 0 : i32
    %0 = arith.cmpi eq, %arg1, %c0_i32 : i32
    %1 = arith.extui %0 : i1 to i32
    %c0_i32_0 = arith.constant 0 : i32
    %2 = arith.cmpi ne, %1, %c0_i32_0 : i32
    scf.if %2 {
      %cst_18 = arith.constant 0.000000e+00 : f32
      %44 = vector.broadcast %cst_18 : f32 to vector<1x1x1xf32>
      %c0_19 = arith.constant 0 : index
      %c0_20 = arith.constant 0 : index
      %c0_21 = arith.constant 0 : index
      %45 = vector.load %arg4[%c0_19, %c0_20, %c0_21] : memref<1x1x1xf32, #tpu.memory_space<vmem>>, vector<1x1x1xf32>
      tpu.vector_store %arg4[%c0_19, %c0_20, %c0_21], %44 {strides = array<i32>} : memref<1x1x1xf32, #tpu.memory_space<vmem>>, vector<1x1x1xf32>,
    } else {
    }
    %c1_i32 = arith.constant 1 : i32
    %3 = arith.muli %arg0, %c1_i32 : i32
    %4 = arith.addi %3, %arg1 : i32
    %c16_i32 = arith.constant 16 : i32
    %5 = arith.muli %4, %c16_i32 : i32
    %c0 = arith.constant 0 : index
    %c0_1 = arith.constant 0 : index
    %6 = vector.load %arg2[%c0, %c0_1] : memref<16x32xf32, #tpu.memory_space<vmem>>, vector<16x32xf32>
    %c0_2 = arith.constant 0 : index
    %c0_3 = arith.constant 0 : index
    %7 = vector.load %arg3[%c0_2, %c0_3] : memref<16x1xi32, #tpu.memory_space<vmem>>, vector<16x1xi32>
    %8 = tpu.iota {dimensions = array<i32: 0>} : vector<16x1xi32>
    %9 = vector.broadcast %5 : i32 to vector<16x1xi32>
    %10 = arith.addi %9, %8 : vector<16x1xi32>
    %c16_i32_4 = arith.constant 16 : i32
    %11 = vector.broadcast %c16_i32_4 : i32 to vector<16x1xi32>
    %12 = arith.cmpi slt, %10, %11 : vector<16x1xi32>
    %cst = arith.constant 0.000000e+00 : f32
    %13 = vector.shape_cast %12 : vector<16x1xi1> to vector<16x1xi1>
    %14 = vector.broadcast %13 : vector<16x1xi1> to vector<16x32xi1>
    %15 = vector.broadcast %cst : f32 to vector<16x32xf32>
    %16 = arith.select %14, %6, %15 : vector<16x32xi1>, vector<16x32xf32>
    %cst_5 = arith.constant dense<0xFF800000> : vector<16xf32>
    %17 = vector.multi_reduction <maximumf>, %16, %cst_5 [1] : vector<16x32xf32> to vector<16xf32>
    %18 = vector.shape_cast %17 : vector<16xf32> to vector<16x1xf32>
    %19 = vector.broadcast %18 : vector<16x1xf32> to vector<16x32xf32>
    %20 = arith.subf %16, %19 : vector<16x32xf32>
    %21 = math.exp %20 : vector<16x32xf32>
    %cst_6 = arith.constant dense<0.000000e+00> : vector<16xf32>
    %22 = vector.multi_reduction <add>, %21, %cst_6 [1] : vector<16x32xf32> to vector<16xf32>
    %23 = vector.shape_cast %22 : vector<16xf32> to vector<16x1xf32>
    %24 = tpu.iota {dimensions = array<i32: 1>} : vector<16x32xi32>
    %25 = vector.broadcast %7 : vector<16x1xi32> to vector<16x32xi32>
    %26 = arith.cmpi eq, %24, %25 : vector<16x32xi32>
    %cst_7 = arith.constant 0.000000e+00 : f32
    %27 = vector.broadcast %cst_7 : f32 to vector<16x32xf32>
    %28 = arith.select %26, %20, %27 : vector<16x32xi1>, vector<16x32xf32>
    %cst_8 = arith.constant dense<0.000000e+00> : vector<16xf32>
    %29 = vector.multi_reduction <add>, %28, %cst_8 [1] : vector<16x32xf32> to vector<16xf32>
    %30 = vector.shape_cast %29 : vector<16xf32> to vector<16x1xf32>
    %c0_i32_9 = arith.constant 0 : i32
    %31 = vector.broadcast %c0_i32_9 : i32 to vector<16x1xi32>
    %32 = arith.cmpi ne, %7, %31 : vector<16x1xi32>
    %33 = arith.andi %12, %32 : vector<16x1xi1>
    %34 = math.log %23 : vector<16x1xf32>
    %35 = arith.subf %34, %30 : vector<16x1xf32>
    %cst_10 = arith.constant 0.000000e+00 : f32
    %36 = vector.broadcast %cst_10 : f32 to vector<16x1xf32>
    %37 = arith.select %33, %35, %36 : vector<16x1xi1>, vector<16x1xf32>
    %c0_11 = arith.constant 0 : index
    %c0_12 = arith.constant 0 : index
    %c0_13 = arith.constant 0 : index
    %38 = vector.load %arg4[%c0_11, %c0_12, %c0_13] : memref<1x1x1xf32, #tpu.memory_space<vmem>>, vector<1x1x1xf32>
    %cst_14 = arith.constant dense<0.000000e+00> : vector<1xf32>
    %39 = vector.multi_reduction <add>, %37, %cst_14 [0] : vector<16x1xf32> to vector<1xf32>
    %40 = vector.shape_cast %39 : vector<1xf32> to vector<1x1xf32>
    %41 = vector.shape_cast %40 : vector<1x1xf32> to vector<1x1x1xf32>
    %42 = arith.addf %38, %41 : vector<1x1x1xf32>
    %c0_15 = arith.constant 0 : index
    %c0_16 = arith.constant 0 : index
    %c0_17 = arith.constant 0 : index
    %43 = vector.load %arg4[%c0_15, %c0_16, %c0_17] : memref<1x1x1xf32, #tpu.memory_space<vmem>>, vector<1x1x1xf32>
    tpu.vector_store %arg4[%c0_15, %c0_16, %c0_17], %42 {strides = array<i32>} : memref<1x1x1xf32, #tpu.memory_space<vmem>>, vector<1x1x1xf32>,
    return
  }
  func.func @transform_0(%arg0: i32, %arg1: i32) -> (i32, i32) {
    %c1_i32 = arith.constant 1 : i32
    %0 = arith.muli %arg0, %c1_i32 : i32
    %1 = arith.addi %0, %arg1 : i32
    %c0_i32 = arith.constant 0 : i32
    %2 = arith.minsi %1, %c0_i32 : i32
    %c0_i32_0 = arith.constant 0 : i32
    %c0_i32_1 = arith.constant 0 : i32
    return %2, %c0_i32_0 : i32, i32
  }
  func.func @transform_1(%arg0: i32, %arg1: i32) -> (i32, i32) {
    %c1_i32 = arith.constant 1 : i32
    %0 = arith.muli %arg0, %c1_i32 : i32
    %1 = arith.addi %0, %arg1 : i32
    %c0_i32 = arith.constant 0 : i32
    %2 = arith.minsi %1, %c0_i32 : i32
    %c0_i32_0 = arith.constant 0 : i32
    %c0_i32_1 = arith.constant 0 : i32
    return %2, %c0_i32_0 : i32, i32
  }
  func.func @transform_2(%arg0: i32, %arg1: i32) -> (i32, i32, i32) {
    %c0_i32 = arith.constant 0 : i32
    %c0_i32_0 = arith.constant 0 : i32
    %c0_i32_1 = arith.constant 0 : i32
    return %arg0, %c0_i32, %c0_i32_0 : i32, i32, i32
  }
}

</mosaic_0001>

<llo_original>
// kernel: vlvae_loss.2
$region0: #{vlvae_loss.2}
  #allocation0 [shape = 'u32[]', space=smem, size = 0x4, offset = 0x4, fixed_abs, tag = 'smem constant byte address 0x4 - core index']
  #allocation1 [shape = 'u32[144,128]{1,0:T(1,128)}', space=vmem, size = 0x12000, scoped, tag = 'internal scratch']
  %s0 = inlined_call_operand.vmem [shape: f32[16,128], index: 0, kind: input, shape index: {}]
  %s1 = inlined_call_operand.vmem [shape: f32[16,128], index: 1, kind: input, shape index: {}]
  %s2 = inlined_call_operand.vmem [shape: f32[1,1,128], index: 2, kind: output, shape index: {}]
  %s3 = sld [smem:[#allocation0]]
  $region22: #{vlvae_loss.2} parent=0
    _
  %s5 = ssub.s32 1, %s3
  %s6 = scalar_select 0, %s5, %s3
  // Predicated region
  $region2: #{vlvae_loss.2} parent=0 // pred_check
    _
  $region3: #{vlvae_loss.2} parent=0 // pred_check_branch
    %8 = sbr.rel (0) target = $region5
  $region4: #{vlvae_loss.2} parent=0 // pred_region
    %s9 = sadd.s32 0, 0
    %p10 = scmp.lt.s32.totalorder %s9, 0
    %s11 = scalar_select %p10, %s9, 0
    %s12 = smul.u32 2, %s11
    %p13 = scmp.lt.s32.totalorder %s12, 1
    %s14 = scalar_select %p13, %s12, 1
    %s15 = smul.addr %s14, 8
    %s16 = scalar_lea.vmem %s0, %s15
    %s17 = sadd.s32 0, 0
    %p18 = scmp.lt.s32.totalorder %s17, 0
    %s19 = scalar_select %p18, %s17, 0
    %s20 = smul.u32 2, %s19
  $region5: #{vlvae_loss.2} parent=0 // pred_fallthru
    _
  // Predicated region
  $region6: #{vlvae_loss.2} parent=0 // pred_check
    _
  $region7: #{vlvae_loss.2} parent=0 // pred_check_branch
    %22 = sbr.rel (0) target = $region9
  $region8: #{vlvae_loss.2} parent=0 // pred_region
    %s23 = sadd.s32 0, 0
    %p24 = scmp.lt.s32.totalorder %s23, 0
    %s25 = scalar_select %p24, %s23, 0
    %s26 = smul.u32 2, %s25
    %p27 = scmp.lt.s32.totalorder %s26, 1
    %s28 = scalar_select %p27, %s26, 1
    %s29 = smul.addr %s28, 8
    %s30 = scalar_lea.vmem %s1, %s29
    %s31 = sadd.s32 0, 0
    %p32 = scmp.lt.s32.totalorder %s31, 0
    %s33 = scalar_select %p32, %s31, 0
    %s34 = smul.u32 2, %s33
  $region9: #{vlvae_loss.2} parent=0 // pred_fallthru
    _
  %s35 = sadd.s32 0, 0
  %p36 = scmp.lt.s32.totalorder %s35, 0
  %s37 = scalar_select %p36, %s35, 0
  %s38 = smul.u32 2, %s37
  %p39 = scmp.lt.s32.totalorder %s38, 1
  %s40 = scalar_select %p39, %s38, 1
  %s41 = smul.addr %s40, 8
  %s42 = scalar_lea.vmem %s0, %s41
  %s43 = sadd.s32 0, 0
  %p44 = scmp.lt.s32.totalorder %s43, 0
  %s45 = scalar_select %p44, %s43, 0
  %s46 = smul.u32 2, %s45
  %p47 = scmp.lt.s32.totalorder %s46, 1
  %s48 = scalar_select %p47, %s46, 1
  %s49 = smul.addr %s48, 8
  %s50 = scalar_lea.vmem %s1, %s49
  %s51 = sadd.s32 0, 0
  %p52 = scmp.lt.s32.totalorder %s51, 0
  %s53 = scalar_select %p52, %s51, 0
  %s54 = smul.u32 2, %s53
  %p55 = scmp.lt.s32.totalorder %s54, 1
  %s56 = scalar_select %p55, %s54, 1
  %s57 = smul.addr %s56, 8
  %s58 = scalar_lea.vmem %s0, %s57
  %s59 = sadd.s32 0, 0
  %p60 = scmp.lt.s32.totalorder %s59, 0
  %s61 = scalar_select %p60, %s59, 0
  %s62 = smul.u32 2, %s61
  %s63 = sadd.s32 0, 0
  %p64 = scmp.lt.s32.totalorder %s63, 0
  %s65 = scalar_select %p64, %s63, 0
  %s66 = smul.u32 2, %s65
  %p67 = scmp.lt.s32.totalorder %s66, 1
  %s68 = scalar_select %p67, %s66, 1
  %s69 = smul.addr %s68, 8
  %s70 = scalar_lea.vmem %s1, %s69
  %s71 = sadd.s32 0, 0
  %p72 = scmp.lt.s32.totalorder %s71, 0
  %s73 = scalar_select %p72, %s71, 0
  %s74 = smul.u32 2, %s73
  %p75 = scmp.eq.s32.totalorder 0, 0
  // Predicated region
  $region10: #{vlvae_loss.2} parent=0 // pred_check
    %p76 = pneg %p75
  $region11: #{vlvae_loss.2} parent=0 // pred_check_branch
    %78 = sbr.rel (%p76) target = $region13
  $region12: #{vlvae_loss.2} parent=0 // pred_region
    %79 = vst [vmem:[%s2] sm:$0x1] 0.0
  $region13: #{vlvae_loss.2} parent=0 // pred_fallthru
    _
  %s80 = sadd.s32 0, 0
  %s81 = smul.u32 %s80, 16
  %v82 = vld [vmem:[%s58] sm:$0xff]
  %v83 = vld [vmem:[%s58 + $0x8] sm:$0xff]
  %v84 = vld [vmem:[%s70] sm:$0xff]
  %v85 = vld [vmem:[%s70 + $0x8] sm:$0xff]
  %v86 = vsub.f32 %v82, %v84
  %v87 = vsub.f32 %v83, %v85
  %v88 = vlaneseq
  %v89 = vshrl.u32 %v88, 7
  %v90 = vadd.s32 %v89, 8
  %s91 = ssub.s32 16, %s81
  %v92 = vstv %s91
  %vm93 = vcmp.lt.s32.totalorder %v89, %v92
  %vm94 = vcmp.lt.s32.totalorder %v90, %v92
  %v95 = vsel %vm93, 1, 0
  %v96 = vsel %vm94, 1, 0
  %vm97 = vcmp.eq.s32.totalorder %v95, 1
  %vm98 = vcmp.eq.s32.totalorder %v96, 1
  %v99 = vsel %vm97, %v86, 0.0
  %v100 = vsel %vm98, %v87, 0.0
  %v101 = vld [vmem:[%s2] sm:$0x1]
  %v102 = vmul.f32 %v99, %v99
  %v103 = vmul.f32 %v100, %v100
  %v104 = vadd.f32 %v102, %v103
  %v105 = vrot.slane %v104, 4
  %v106 = vadd.f32 %v104, %v105
  %v107 = vrot.slane %v106, 2
  %v108 = vadd.f32 %v106, %v107
  %v109 = vrot.slane %v108, 1
  %v110 = vadd.f32 %v108, %v109
  %v111 = vadd.f32 %v101, %v110
  %112 = vst [vmem:[%s2] sm:$0x1] %v111
  // Predicated region
  $region14: #{vlvae_loss.2} parent=0 // pred_check
    _
  $region15: #{vlvae_loss.2} parent=0 // pred_check_branch
    %114 = sbr.rel (0) target = $region17
  $region16: #{vlvae_loss.2} parent=0 // pred_region
    _
  $region17: #{vlvae_loss.2} parent=0 // pred_fallthru
    _
  // Predicated region
  $region18: #{vlvae_loss.2} parent=0 // pred_check
    _
  $region19: #{vlvae_loss.2} parent=0 // pred_check_branch
    %116 = sbr.rel (0) target = $region21
  $region20: #{vlvae_loss.2} parent=0 // pred_region
    _
  $region21: #{vlvae_loss.2} parent=0 // pred_fallthru
    _

// kernel: vlvae_loss.3
$region0: #{vlvae_loss.3}
  #allocation0 [shape = 'u32[]', space=smem, size = 0x4, offset = 0x4, fixed_abs, tag = 'smem constant byte address 0x4 - core index']
  #allocation1 [shape = 'u32[144,128]{1,0:T(1,128)}', space=vmem, size = 0x12000, scoped, tag = 'internal scratch']
  %s0 = inlined_call_operand.vmem [shape: f32[16,32], index: 0, kind: input, shape index: {}]
  %s1 = inlined_call_operand.vmem [shape: s32[16,1], index: 1, kind: input, shape index: {}]
  %s2 = inlined_call_operand.hbm [shape: f32[1,1,1], index: 2, kind: output, shape index: {}]
  %s3 = sld [smem:[#allocation0]]
  $region22: #{vlvae_loss.3} parent=0
    _
  %s5 = ssub.s32 1, %s3
  %s6 = scalar_select 0, %s5, %s3
  $region1: #{vlvae_loss.3} parent=0
    #allocation2 [shape = 'u8[512]{0}', space=vmem, size = 0x400, scoped, tag = 'output window, operand 0, single buffered']
    #allocation3 [shape = 's32[1]{0}', space=sflag, size = 0x4, scoped, tag = 'scoped memory for vlvae_loss.3']
    %7 = vsyncpa [#allocation3], 0
    // Predicated region
    $region2: #{vlvae_loss.3} parent=1 // pred_check
      _
    $region3: #{vlvae_loss.3} parent=1 // pred_check_branch
      %9 = sbr.rel (0) target = $region5
    $region4: #{vlvae_loss.3} parent=1 // pred_region
      %s10 = sadd.s32 0, 0
      %p11 = scmp.lt.s32.totalorder %s10, 0
      %s12 = scalar_select %p11, %s10, 0
      %s13 = smul.u32 2, %s12
      %p14 = scmp.lt.s32.totalorder %s13, 1
      %s15 = scalar_select %p14, %s13, 1
      %s16 = smul.addr %s15, 8
      %s17 = scalar_lea.vmem %s0, %s16
      %s18 = sadd.s32 0, 0
      %p19 = scmp.lt.s32.totalorder %s18, 0
      %s20 = scalar_select %p19, %s18, 0
      %s21 = smul.u32 2, %s20
    $region5: #{vlvae_loss.3} parent=1 // pred_fallthru
      _
    // Predicated region
    $region6: #{vlvae_loss.3} parent=1 // pred_check
      _
    $region7: #{vlvae_loss.3} parent=1 // pred_check_branch
      %23 = sbr.rel (0) target = $region9
    $region8: #{vlvae_loss.3} parent=1 // pred_region
      %s24 = sadd.s32 0, 0
      %p25 = scmp.lt.s32.totalorder %s24, 0
      %s26 = scalar_select %p25, %s24, 0
      %s27 = smul.u32 2, %s26
      %p28 = scmp.lt.s32.totalorder %s27, 1
      %s29 = scalar_select %p28, %s27, 1
      %s30 = smul.addr %s29, 8
      %s31 = scalar_lea.vmem %s1, %s30
      %s32 = sadd.s32 0, 0
      %p33 = scmp.lt.s32.totalorder %s32, 0
      %s34 = scalar_select %p33, %s32, 0
      %s35 = smul.u32 2, %s34
    $region9: #{vlvae_loss.3} parent=1 // pred_fallthru
      _
    %s36 = sadd.s32 0, 0
    %p37 = scmp.lt.s32.totalorder %s36, 0
    %s38 = scalar_select %p37, %s36, 0
    %s39 = smul.u32 2, %s38
    %p40 = scmp.lt.s32.totalorder %s39, 1
    %s41 = scalar_select %p40, %s39, 1
    %s42 = smul.addr %s41, 8
    %s43 = scalar_lea.vmem %s0, %s42
    %s44 = sadd.s32 0, 0
    %p45 = scmp.lt.s32.totalorder %s44, 0
    %s46 = scalar_select %p45, %s44, 0
    %s47 = smul.u32 2, %s46
    %p48 = scmp.lt.s32.totalorder %s47, 1
    %s49 = scalar_select %p48, %s47, 1
    %s50 = smul.addr %s49, 8
    %s51 = scalar_lea.vmem %s1, %s50
    %s52 = sadd.s32 0, 0
    %p53 = scmp.lt.s32.totalorder %s52, 0
    %s54 = scalar_select %p53, %s52, 0
    %s55 = smul.u32 2, %s54
    %p56 = scmp.lt.s32.totalorder %s55, 1
    %s57 = scalar_select %p56, %s55, 1
    %s58 = smul.addr %s57, 8
    %s59 = scalar_lea.vmem %s0, %s58
    %s60 = sadd.s32 0, 0
    %p61 = scmp.lt.s32.totalorder %s60, 0
    %s62 = scalar_select %p61, %s60, 0
    %s63 = smul.u32 2, %s62
    %s64 = sadd.s32 0, 0
    %p65 = scmp.lt.s32.totalorder %s64, 0
    %s66 = scalar_select %p65, %s64, 0
    %s67 = smul.u32 2, %s66
    %p68 = scmp.lt.s32.totalorder %s67, 1
    %s69 = scalar_select %p68, %s67, 1
    %s70 = smul.addr %s69, 8
    %s71 = scalar_lea.vmem %s1, %s70
    %s72 = sadd.s32 0, 0
    %p73 = scmp.lt.s32.totalorder %s72, 0
    %s74 = scalar_select %p73, %s72, 0
    %s75 = smul.u32 2, %s74
    %p76 = scmp.eq.s32.totalorder 0, 0
    // Predicated region
    $region10: #{vlvae_loss.3} parent=1 // pred_check
      %p77 = pneg %p76
    $region11: #{vlvae_loss.3} parent=1 // pred_check_branch
      %79 = sbr.rel (%p77) target = $region13
    $region12: #{vlvae_loss.3} parent=1 // pred_region
      %vm80 = vcmask 0
      %81 = vst.msk [vmem:[#allocation2] sm:$0x1] %vm80, 0.0
    $region13: #{vlvae_loss.3} parent=1 // pred_fallthru
      _
    %s82 = sadd.s32 0, 0
    %s83 = smul.u32 %s82, 16
    %v84 = vld [vmem:[%s59] sm:$0xff]
    %v85 = vld [vmem:[%s59 + $0x8] sm:$0xff]
    %v86 = vld [vmem:[%s71] sm:$0xff]
    %v87 = vld [vmem:[%s71 + $0x8] sm:$0xff]
    %v88 = vlaneseq
    %v89 = vshrl.u32 %v88, 7
    %v90 = vadd.s32 %v89, 8
    %v91 = vstv %s83
    %v92 = vadd.s32 %v91, %v89
    %v93 = vadd.s32 %v91, %v90
    %vm94 = vcmp.lt.s32.totalorder %v92, 16
    %vm95 = vcmp.lt.s32.totalorder %v93, 16
    %v96 = vsel %vm94, 1, 0
    %v97 = vsel %vm95, 1, 0
    %vm98 = vcmp.eq.s32.totalorder %v96, 1
    %vm99 = vcmp.eq.s32.totalorder %v97, 1
    %v100 = vsel %vm98, %v84, 0.0
    %v101 = vsel %vm99, %v85, 0.0
    %vm102 = vcmask 261120
    %v103 = vsel %vm102, %v100, -inf
    %104 = vmax.xlane.f32.xlu0 %v103
    %v105 = vpop.xlane.xlu0 %104
    %v106 = vsel %vm102, %v101, -inf
    %107 = vmax.xlane.f32.xlu0 %v106
    %v108 = vpop.xlane.xlu0 %107
    %v109 = vsub.f32 %v100, %v105
    %v110 = vsub.f32 %v101, %v108
    %v111 = vmul.f32 %v109, 1.442695
    %v112 = vpow.pop %v111
    %v113 = vmul.f32 %v110, 1.442695
    %v114 = vpow.pop %v113
    %v115 = vsel %vm102, %v112, 0.0
    %116 = vadd.xlane.f32.xlu0 %v115
    %v117 = vpop.xlane.xlu0 %116
    %v118 = vsel %vm102, %v114, 0.0
    %119 = vadd.xlane.f32.xlu0 %v118
    %v120 = vpop.xlane.xlu0 %119
    %v121 = vlaneseq
    %v122 = vand.u32 %v121, 127
    %123 = vset.pattern.permute.xlu0 0
    %124 = vperm.xlu0 %123, %v86
    %v125 = vpop.permute.xlu0 %124
    %126 = vset.pattern.permute.xlu0 0
    %127 = vperm.xlu0 %126, %v87
    %v128 = vpop.permute.xlu0 %127
    %vm129 = vcmp.eq.s32.totalorder %v122, %v125
    %vm130 = vcmp.eq.s32.totalorder %v122, %v128
    %v131 = vsel %vm129, %v109, 0.0
    %v132 = vsel %vm130, %v110, 0.0
    %v133 = vsel %vm102, %v131, 0.0
    %134 = vadd.xlane.f32.xlu0 %v133
    %v135 = vpop.xlane.xlu0 %134
    %v136 = vsel %vm102, %v132, 0.0
    %137 = vadd.xlane.f32.xlu0 %v136
    %v138 = vpop.xlane.xlu0 %137
    %vm139 = vcmp.ne.s32.totalorder %v86, 0
    %vm140 = vcmp.ne.s32.totalorder %v87, 0
    %vm141 = vmand %vm94, %vm139
    %vm142 = vmand %vm95, %vm140
    %v143 = vlog2.pop %v117
    %v144 = vmul.f32 %v143, 0.6931472
    %v145 = vlog2.pop %v120
    %v146 = vmul.f32 %v145, 0.6931472
    %v147 = vsub.f32 %v144, %v135
    %v148 = vsub.f32 %v146, %v138
    %v149 = vsel %vm141, %v147, 0.0
    %v150 = vsel %vm142, %v148, 0.0
    %v151 = vld [vmem:[#allocation2] sm:$0x1]
    %vm152 = vcmask 7168
    %v153 = vsel %vm152, %v149, 0.0
    %v154 = vsel %vm152, %v150, 0.0
    %v155 = vadd.f32 %v153, %v154
    %v156 = vrot.slane %v155, 4
    %v157 = vadd.f32 %v155, %v156
    %v158 = vrot.slane %v157, 2
    %v159 = vadd.f32 %v157, %v158
    %v160 = vrot.slane %v159, 1
    %v161 = vadd.f32 %v159, %v160
    %v162 = vadd.f32 %v151, %v161
    %vm163 = vcmask 0
    %164 = vst.msk [vmem:[#allocation2] sm:$0x1] %vm163, %v162
    // Predicated region
    $region14: #{vlvae_loss.3} parent=1 // pred_check
      _
    $region15: #{vlvae_loss.3} parent=1 // pred_check_branch
      %166 = sbr.rel (0) target = $region17
    $region16: #{vlvae_loss.3} parent=1 // pred_region
      %s168 = ssub.s32 16, 16
      %169 = vsyncadd [#allocation3], %s168
      %s171 = sshll.u32 [#allocation2], 4
      %s172 = int_to_ptr.vmem [resolvable:$true] %s171
      %174 = dma.vmem_to_hbm [thread:$0]  %s172, 16, %s2, [#allocation3]
    $region17: #{vlvae_loss.3} parent=1 // pred_fallthru
      _
    // Predicated region
    $region18: #{vlvae_loss.3} parent=1 // pred_check
      _
    $region19: #{vlvae_loss.3} parent=1 // pred_check_branch
      %176 = sbr.rel (0) target = $region21
    $region20: #{vlvae_loss.3} parent=1 // pred_region
      %177 = dma.done [#allocation3], 16
    $region21: #{vlvae_loss.3} parent=1 // pred_fallthru
      _
    %178 = vsyncpa [#allocation3], 1

</llo_original>
